<compile_context>
chip_gen: v7x
topology: tpu7x:2x2x1
jax: 0.10.0
libtpu: 0.0.40
codegen_flags: <defaults>
</compile_context>

<pallas_src>
import jax
import jax.numpy as jnp
from jax.experimental import pallas as pl
from jax.experimental.pallas import tpu as pltpu


def _round_up(x, m):
    return ((x + m - 1) // m) * m


# ----------------------------------------------------------------------------
# Fused kernel:
#   gates = z @ W_big + b_big            (one GEMM, 5*h_dim output columns)
#   i,o,u,fl,fr -> c, h                   (per node tile)
#   tile 0:   h_t = h[0:1] ; q = W0 h_t + b0 ; e_s = 0
#   all tiles: e_s += valid_mask @ (h * exp(h * q))
#   last tile: e_t = tanh(W1 e_s + W2 h_t) ; t_t = max(softmax(W_tt e_t))
# ----------------------------------------------------------------------------
def _make_fused_kernel(n_valid, h_dim, tile_n):
    f32 = jnp.float32

    def kernel(
        z_ref, cl_ref, cr_ref,
        wbig_ref, bbig_ref,
        w0_ref, b0_ref, w1_ref, b1_ref, w2_ref, b2_ref,
        wtt_ref, btt_ref,
        h_out_ref, c_out_ref, et_out_ref, tt_out_ref,
        ht_scr, q_scr, es_scr,
    ):
        t = pl.program_id(0)
        n_tiles = pl.num_programs(0)

        # --- BinaryTreeLSTMCell: one fused GEMM + gate math ------------------
        gates = (
            jnp.dot(z_ref[...], wbig_ref[...], preferred_element_type=f32)
            + bbig_ref[...]
        )  # (tile_n, 5*h_dim)
        i_g = jax.nn.sigmoid(gates[:, 0 * h_dim:1 * h_dim])
        o_g = jax.nn.sigmoid(gates[:, 1 * h_dim:2 * h_dim])
        u_g = jnp.tanh(gates[:, 2 * h_dim:3 * h_dim])
        fl = jax.nn.sigmoid(gates[:, 3 * h_dim:4 * h_dim])
        fr = jax.nn.sigmoid(gates[:, 4 * h_dim:5 * h_dim])

        c = i_g * u_g + fl * cl_ref[...] + fr * cr_ref[...]
        h = o_g * jnp.tanh(c)
        h_out_ref[...] = h.astype(h_out_ref.dtype)
        c_out_ref[...] = c.astype(c_out_ref.dtype)

        # --- Attention state (root = global row 0, i.e. row 0 of tile 0) -----
        @pl.when(t == 0)
        def _():
            h_t = h[0:1, :]
            ht_scr[...] = h_t
            q_scr[...] = (
                jnp.dot(h_t, w0_ref[...], preferred_element_type=f32) + b0_ref[...]
            )
            es_scr[...] = jnp.zeros((1, h_dim), f32)

        # e_s accumulation as a (1, tile_n) @ (tile_n, h) matmul; the row vector
        # doubles as the validity mask for zero-padded node rows.  h is bounded
        # (|h| <= 1) so masked contributions are finite.
        col = jax.lax.broadcasted_iota(jnp.int32, (1, tile_n), 1)
        valid = ((t * tile_n + col) < n_valid).astype(f32)        # (1, tile_n)
        contrib = h * jnp.exp(h * q_scr[...])                      # (tile_n, h)
        es_scr[...] += jnp.dot(valid, contrib, preferred_element_type=f32)

        # --- Decoder head, emitted once at the last grid step -----------------
        @pl.when(t == n_tiles - 1)
        def _():
            h_t = ht_scr[...]
            e_t = jnp.tanh(
                jnp.dot(es_scr[...], w1_ref[...], preferred_element_type=f32)
                + b1_ref[...]
                + jnp.dot(h_t, w2_ref[...], preferred_element_type=f32)
                + b2_ref[...]
            )
            logits = (
                jnp.dot(e_t, wtt_ref[...], preferred_element_type=f32) + btt_ref[...]
            )
            m = jnp.max(logits, axis=-1, keepdims=True)
            denom = jnp.sum(jnp.exp(logits - m), axis=-1, keepdims=True)
            # max(softmax(logits)) == 1 / sum(exp(logits - max))
            t_t = pl.reciprocal(denom, approx=True)
            et_out_ref[...] = e_t.astype(et_out_ref.dtype)
            tt_out_ref[...] = t_t.astype(tt_out_ref.dtype)

    return kernel


# ----------------------------------------------------------------------------
# Parameter init (shapes from the module's __init__); nn.Linear weights are
# stored PRE-TRANSPOSED as (in_features, out_features) so that y = x @ W + b.
# ----------------------------------------------------------------------------
def init_params(key, in_dim, h_dim, vocab_size):
    def lin(k, fan_in, fan_out):
        kw, kb = jax.random.split(k)
        bound = 1.0 / jnp.sqrt(fan_in)
        w = jax.random.uniform(kw, (fan_in, fan_out), jnp.float32, -bound, bound)
        b = jax.random.uniform(kb, (1, fan_out), jnp.float32, -bound, bound)
        return w, b

    keys = jax.random.split(key, 14)
    p = {}
    # BinaryTreeLSTMCell
    p["w_iou_x"], p["b_iou_x"] = lin(keys[0], in_dim, 3 * h_dim)
    p["w_iou_hl"], p["b_iou_hl"] = lin(keys[1], h_dim, 3 * h_dim)
    p["w_iou_hr"], p["b_iou_hr"] = lin(keys[2], h_dim, 3 * h_dim)
    p["w_fx"], p["b_fx"] = lin(keys[3], in_dim, h_dim)
    p["w_fh00"], p["b_fh00"] = lin(keys[4], h_dim, h_dim)
    p["w_fh01"], p["b_fh01"] = lin(keys[5], h_dim, h_dim)
    p["w_fh10"], p["b_fh10"] = lin(keys[6], h_dim, h_dim)
    p["w_fh11"], p["b_fh11"] = lin(keys[7], h_dim, h_dim)
    # Attention
    p["w0"], p["b0"] = lin(keys[8], h_dim, h_dim)
    p["w1"], p["b1"] = lin(keys[9], h_dim, h_dim)
    p["w2"], p["b2"] = lin(keys[10], h_dim, h_dim)
    # Decoder
    p["w_tt"], p["b_tt"] = lin(keys[11], h_dim, vocab_size)
    return p


def fuse_cell_params(p, in_dim, h_dim):
    """Build the (K_pad, 5h) fused cell weight and (1, 5h) fused bias (done once)."""
    k = in_dim + 2 * h_dim
    k_pad = _round_up(k, 128)
    sx = slice(0, in_dim)
    sl = slice(in_dim, in_dim + h_dim)
    sr = slice(in_dim + h_dim, in_dim + 2 * h_dim)

    w_big = jnp.zeros((k_pad, 5 * h_dim), jnp.float32)
    # iou columns [0, 3h)
    w_big = w_big.at[sx, 0:3 * h_dim].set(p["w_iou_x"])
    w_big = w_big.at[sl, 0:3 * h_dim].set(p["w_iou_hl"])
    w_big = w_big.at[sr, 0:3 * h_dim].set(p["w_iou_hr"])
    # fl columns [3h, 4h): fl = sigmoid(f_x(x) + f_h[0][0](hr) + f_h[0][1](hl))
    w_big = w_big.at[sx, 3 * h_dim:4 * h_dim].set(p["w_fx"])
    w_big = w_big.at[sl, 3 * h_dim:4 * h_dim].set(p["w_fh01"])
    w_big = w_big.at[sr, 3 * h_dim:4 * h_dim].set(p["w_fh00"])
    # fr columns [4h, 5h): fr = sigmoid(f_x(x) + f_h[1][0](hr) + f_h[1][1](hl))
    w_big = w_big.at[sx, 4 * h_dim:5 * h_dim].set(p["w_fx"])
    w_big = w_big.at[sl, 4 * h_dim:5 * h_dim].set(p["w_fh11"])
    w_big = w_big.at[sr, 4 * h_dim:5 * h_dim].set(p["w_fh10"])

    b_big = jnp.concatenate(
        [
            p["b_iou_x"] + p["b_iou_hl"] + p["b_iou_hr"],
            p["b_fx"] + p["b_fh00"] + p["b_fh01"],
            p["b_fx"] + p["b_fh10"] + p["b_fh11"],
        ],
        axis=1,
    )

    fused = dict(p)
    fused["w_big"] = w_big
    fused["b_big"] = b_big
    return fused


# ----------------------------------------------------------------------------
# Forward: one pallas_call, node-tiled grid.
# ----------------------------------------------------------------------------
def tree_to_tree_lstm_forward(batch, fused_params):
    x, hl, hr, cl, cr = batch
    n, in_dim = x.shape
    h_dim = hl.shape[1]
    vocab = fused_params["w_tt"].shape[1]
    k_pad = fused_params["w_big"].shape[0]

    tile_n = min(256, _round_up(n, 8))
    n_pad = _round_up(n, tile_n)
    grid = (n_pad // tile_n,)

    # Layout plumbing (wrapper-side): concat [x|hl|hr] and zero-pad to a
    # lane-dense (n_pad, k_pad) GEMM input.
    k = in_dim + 2 * h_dim
    z = jnp.concatenate([x, hl, hr], axis=1)
    z = jnp.pad(z, ((0, n_pad - n), (0, k_pad - k)))
    cl_p = jnp.pad(cl, ((0, n_pad - n), (0, 0)))
    cr_p = jnp.pad(cr, ((0, n_pad - n), (0, 0)))

    def const_spec(r, c):
        return pl.BlockSpec((r, c), lambda i: (0, 0))

    kernel = _make_fused_kernel(n, h_dim, tile_n)

    h_pad, c_pad, e_t, t_t = pl.pallas_call(
        kernel,
        out_shape=(
            jax.ShapeDtypeStruct((n_pad, h_dim), jnp.float32),
            jax.ShapeDtypeStruct((n_pad, h_dim), jnp.float32),
            jax.ShapeDtypeStruct((1, h_dim), jnp.float32),
            jax.ShapeDtypeStruct((1, 1), jnp.float32),
        ),
        grid_spec=pltpu.PrefetchScalarGridSpec(
            num_scalar_prefetch=0,
            grid=grid,
            in_specs=[
                pl.BlockSpec((tile_n, k_pad), lambda i: (i, 0)),   # z
                pl.BlockSpec((tile_n, h_dim), lambda i: (i, 0)),   # cl
                pl.BlockSpec((tile_n, h_dim), lambda i: (i, 0)),   # cr
                const_spec(k_pad, 5 * h_dim),                      # w_big
                const_spec(1, 5 * h_dim),                          # b_big
                const_spec(h_dim, h_dim), const_spec(1, h_dim),    # w0, b0
                const_spec(h_dim, h_dim), const_spec(1, h_dim),    # w1, b1
                const_spec(h_dim, h_dim), const_spec(1, h_dim),    # w2, b2
                const_spec(h_dim, vocab), const_spec(1, vocab),    # w_tt, b_tt
            ],
            out_specs=(
                pl.BlockSpec((tile_n, h_dim), lambda i: (i, 0)),   # h
                pl.BlockSpec((tile_n, h_dim), lambda i: (i, 0)),   # c
                const_spec(1, h_dim),                              # e_t
                const_spec(1, 1),                                  # t_t
            ),
            scratch_shapes=[
                pltpu.VMEM((1, h_dim), jnp.float32),   # ht_scr (root h)
                pltpu.VMEM((1, h_dim), jnp.float32),   # q_scr
                pltpu.VMEM((1, h_dim), jnp.float32),   # es_scr accumulator
            ],
        ),
        compiler_params=pltpu.CompilerParams(
            # sequential: e_s accumulator + root-state scratch carry across tiles
            dimension_semantics=("arbitrary",),
        ),
    )(
        z, cl_p, cr_p,
        fused_params["w_big"], fused_params["b_big"],
        fused_params["w0"], fused_params["b0"],
        fused_params["w1"], fused_params["b1"],
        fused_params["w2"], fused_params["b2"],
        fused_params["w_tt"], fused_params["b_tt"],
    )

    return h_pad[:n], c_pad[:n], e_t, t_t


# ----------------------------------------------------------------------------
# Reference in plain JAX (unfused params) for sanity check
# ----------------------------------------------------------------------------
def reference_forward(batch, p):
    x, hl, hr, cl, cr = batch
    iou = (x @ p["w_iou_x"] + p["b_iou_x"]
           + hl @ p["w_iou_hl"] + p["b_iou_hl"]
           + hr @ p["w_iou_hr"] + p["b_iou_hr"])
    hd = hl.shape[1]
    i = jax.nn.sigmoid(iou[:, :hd])
    o = jax.nn.sigmoid(iou[:, hd:2 * hd])
    u = jnp.tanh(iou[:, 2 * hd:])
    fx = x @ p["w_fx"] + p["b_fx"]
    fl = jax.nn.sigmoid(fx + hr @ p["w_fh00"] + p["b_fh00"] + hl @ p["w_fh01"] + p["b_fh01"])
    fr = jax.nn.sigmoid(fx + hr @ p["w_fh10"] + p["b_fh10"] + hl @ p["w_fh11"] + p["b_fh11"])
    c = i * u + fl * cl + fr * cr
    h = o * jnp.tanh(c)
    h_t = h[0:1]
    q = h_t @ p["w0"] + p["b0"]
    e_s = jnp.sum(h * jnp.exp(h * q), axis=0, keepdims=True)
    e_t = jnp.tanh(e_s @ p["w1"] + p["b1"] + h_t @ p["w2"] + p["b2"])
    logits = e_t @ p["w_tt"] + p["b_tt"]
    t_t = jnp.max(jax.nn.softmax(logits, axis=-1), axis=-1, keepdims=True)
    return h, c, e_t, t_t


if __name__ == "__main__":
    N_NODES = 8      # nodes in the (flattened) tree batch
    IN_DIM = 16
    H_DIM = 32
    VOCAB = 64

    key = jax.random.PRNGKey(0)
    k_param, k_x, k_hl, k_hr, k_cl, k_cr = jax.random.split(key, 6)
    params = init_params(k_param, IN_DIM, H_DIM, VOCAB)
    fused = fuse_cell_params(params, IN_DIM, H_DIM)

    x = jax.random.normal(k_x, (N_NODES, IN_DIM), jnp.float32)
    hl = jax.random.normal(k_hl, (N_NODES, H_DIM), jnp.float32) * 0.1
    hr = jax.random.normal(k_hr, (N_NODES, H_DIM), jnp.float32) * 0.1
    cl = jax.random.normal(k_cl, (N_NODES, H_DIM), jnp.float32) * 0.1
    cr = jax.random.normal(k_cr, (N_NODES, H_DIM), jnp.float32) * 0.1
    batch = (x, hl, hr, cl, cr)

    h, c, e_t, t_t = tree_to_tree_lstm_forward(batch, fused)
    jax.block_until_ready((h, c, e_t, t_t))

    h_r, c_r, e_t_r, t_t_r = reference_forward(batch, params)
    assert jnp.allclose(h, h_r, atol=1e-4, rtol=1e-4), "h mismatch"
    assert jnp.allclose(c, c_r, atol=1e-4, rtol=1e-4), "c mismatch"
    assert jnp.allclose(e_t, e_t_r, atol=1e-4, rtol=1e-4), "e_t mismatch"
    assert jnp.allclose(t_t, t_t_r, atol=1e-4, rtol=1e-3), "t_t mismatch"

    print("KERNEL_OK")
</pallas_src>

<mosaic_0001>
module attributes {stable_mosaic.version = 11 : i64} {
  func.func @kernel(%arg0: i32, %arg1: memref<8x128xf32, #tpu.memory_space<vmem>>, %arg2: memref<8x32xf32, #tpu.memory_space<vmem>>, %arg3: memref<8x32xf32, #tpu.memory_space<vmem>>, %arg4: memref<128x160xf32, #tpu.memory_space<vmem>>, %arg5: memref<1x160xf32, #tpu.memory_space<vmem>>, %arg6: memref<32x32xf32, #tpu.memory_space<vmem>>, %arg7: memref<1x32xf32, #tpu.memory_space<vmem>>, %arg8: memref<32x32xf32, #tpu.memory_space<vmem>>, %arg9: memref<1x32xf32, #tpu.memory_space<vmem>>, %arg10: memref<32x32xf32, #tpu.memory_space<vmem>>, %arg11: memref<1x32xf32, #tpu.memory_space<vmem>>, %arg12: memref<32x64xf32, #tpu.memory_space<vmem>>, %arg13: memref<1x64xf32, #tpu.memory_space<vmem>>, %arg14: memref<8x32xf32, #tpu.memory_space<vmem>>, %arg15: memref<8x32xf32, #tpu.memory_space<vmem>>, %arg16: memref<1x32xf32, #tpu.memory_space<vmem>>, %arg17: memref<1x1xf32, #tpu.memory_space<vmem>>, %arg18: memref<1x32xf32, #tpu.memory_space<vmem>>, %arg19: memref<1x32xf32, #tpu.memory_space<vmem>>, %arg20: memref<1x32xf32, #tpu.memory_space<vmem>>) attributes {dimension_semantics = [#tpu.dimension_semantics<arbitrary>], iteration_bounds = array<i64: 1>, scalar_prefetch = 0 : i64, scratch_operands = 3 : i64, tpu.core_type = #tpu.core_type<tc>, window_params = [{transform_indices = @transform_0, window_bounds = array<i64: 8, 128>}, {transform_indices = @transform_1, window_bounds = array<i64: 8, 32>}, {transform_indices = @transform_2, window_bounds = array<i64: 8, 32>}, {pipeline_mode = #tpu.pipeline_mode<synchronous>, transform_indices = @transform_3, window_bounds = array<i64: 128, 160>}, {pipeline_mode = #tpu.pipeline_mode<synchronous>, transform_indices = @transform_4, window_bounds = array<i64: 1, 160>}, {pipeline_mode = #tpu.pipeline_mode<synchronous>, transform_indices = @transform_5, window_bounds = array<i64: 32, 32>}, {pipeline_mode = #tpu.pipeline_mode<synchronous>, transform_indices = @transform_6, window_bounds = array<i64: 1, 32>}, {pipeline_mode = #tpu.pipeline_mode<synchronous>, transform_indices = @transform_7, window_bounds = array<i64: 32, 32>}, {pipeline_mode = #tpu.pipeline_mode<synchronous>, transform_indices = @transform_8, window_bounds = array<i64: 1, 32>}, {pipeline_mode = #tpu.pipeline_mode<synchronous>, transform_indices = @transform_9, window_bounds = array<i64: 32, 32>}, {pipeline_mode = #tpu.pipeline_mode<synchronous>, transform_indices = @transform_10, window_bounds = array<i64: 1, 32>}, {pipeline_mode = #tpu.pipeline_mode<synchronous>, transform_indices = @transform_11, window_bounds = array<i64: 32, 64>}, {pipeline_mode = #tpu.pipeline_mode<synchronous>, transform_indices = @transform_12, window_bounds = array<i64: 1, 64>}, {transform_indices = @transform_13, window_bounds = array<i64: 8, 32>}, {transform_indices = @transform_14, window_bounds = array<i64: 8, 32>}, {pipeline_mode = #tpu.pipeline_mode<synchronous>, transform_indices = @transform_15, window_bounds = array<i64: 1, 32>}, {pipeline_mode = #tpu.pipeline_mode<synchronous>, transform_indices = @transform_16, window_bounds = array<i64: 1, 1>}]} {
    %c0 = arith.constant 0 : index
    %c0_0 = arith.constant 0 : index
    %0 = vector.load %arg1[%c0, %c0_0] : memref<8x128xf32, #tpu.memory_space<vmem>>, vector<8x128xf32>
    %c0_1 = arith.constant 0 : index
    %c0_2 = arith.constant 0 : index
    %1 = vector.load %arg4[%c0_1, %c0_2] : memref<128x160xf32, #tpu.memory_space<vmem>>, vector<128x160xf32>
    %cst = arith.constant dense<0.000000e+00> : vector<8x160xf32>
    %2 = tpu.matmul %0, %1, %cst {dimension_numbers = #tpu.dot_dimension_numbers<[1], [0], [0], [1], [0, 0, 1, 1], [], []>} : vector<8x128xf32>, vector<128x160xf32>, vector<8x160xf32> -> vector<8x160xf32>
    %c0_3 = arith.constant 0 : index
    %c0_4 = arith.constant 0 : index
    %3 = vector.load %arg5[%c0_3, %c0_4] : memref<1x160xf32, #tpu.memory_space<vmem>>, vector<1x160xf32>
    %4 = vector.broadcast %3 : vector<1x160xf32> to vector<8x160xf32>
    %5 = arith.addf %2, %4 : vector<8x160xf32>
    %6 = vector.extract_strided_slice %5 {offsets = [0, 0], sizes = [8, 32], strides = [1, 1]} : vector<8x160xf32> to vector<8x32xf32>
    %7 = arith.negf %6 : vector<8x32xf32>
    %8 = math.exp %7 : vector<8x32xf32>
    %cst_5 = arith.constant 1.000000e+00 : f32
    %9 = vector.broadcast %cst_5 : f32 to vector<8x32xf32>
    %10 = arith.addf %9, %8 : vector<8x32xf32>
    %11 = arith.divf %9, %10 : vector<8x32xf32>
    %12 = vector.extract_strided_slice %5 {offsets = [0, 32], sizes = [8, 32], strides = [1, 1]} : vector<8x160xf32> to vector<8x32xf32>
    %13 = arith.negf %12 : vector<8x32xf32>
    %14 = math.exp %13 : vector<8x32xf32>
    %cst_6 = arith.constant 1.000000e+00 : f32
    %15 = vector.broadcast %cst_6 : f32 to vector<8x32xf32>
    %16 = arith.addf %15, %14 : vector<8x32xf32>
    %17 = arith.divf %15, %16 : vector<8x32xf32>
    %18 = vector.extract_strided_slice %5 {offsets = [0, 64], sizes = [8, 32], strides = [1, 1]} : vector<8x160xf32> to vector<8x32xf32>
    %19 = math.tanh %18 : vector<8x32xf32>
    %20 = vector.extract_strided_slice %5 {offsets = [0, 96], sizes = [8, 32], strides = [1, 1]} : vector<8x160xf32> to vector<8x32xf32>
    %21 = arith.negf %20 : vector<8x32xf32>
    %22 = math.exp %21 : vector<8x32xf32>
    %cst_7 = arith.constant 1.000000e+00 : f32
    %23 = vector.broadcast %cst_7 : f32 to vector<8x32xf32>
    %24 = arith.addf %23, %22 : vector<8x32xf32>
    %25 = arith.divf %23, %24 : vector<8x32xf32>
    %26 = vector.extract_strided_slice %5 {offsets = [0, 128], sizes = [8, 32], strides = [1, 1]} : vector<8x160xf32> to vector<8x32xf32>
    %27 = arith.negf %26 : vector<8x32xf32>
    %28 = math.exp %27 : vector<8x32xf32>
    %cst_8 = arith.constant 1.000000e+00 : f32
    %29 = vector.broadcast %cst_8 : f32 to vector<8x32xf32>
    %30 = arith.addf %29, %28 : vector<8x32xf32>
    %31 = arith.divf %29, %30 : vector<8x32xf32>
    %32 = arith.mulf %11, %19 : vector<8x32xf32>
    %c0_9 = arith.constant 0 : index
    %c0_10 = arith.constant 0 : index
    %33 = vector.load %arg2[%c0_9, %c0_10] : memref<8x32xf32, #tpu.memory_space<vmem>>, vector<8x32xf32>
    %34 = arith.mulf %25, %33 : vector<8x32xf32>
    %35 = arith.addf %32, %34 : vector<8x32xf32>
    %c0_11 = arith.constant 0 : index
    %c0_12 = arith.constant 0 : index
    %36 = vector.load %arg3[%c0_11, %c0_12] : memref<8x32xf32, #tpu.memory_space<vmem>>, vector<8x32xf32>
    %37 = arith.mulf %31, %36 : vector<8x32xf32>
    %38 = arith.addf %35, %37 : vector<8x32xf32>
    %39 = math.tanh %38 : vector<8x32xf32>
    %40 = arith.mulf %17, %39 : vector<8x32xf32>
    %c0_13 = arith.constant 0 : index
    %c0_14 = arith.constant 0 : index
    %41 = vector.load %arg14[%c0_13, %c0_14] : memref<8x32xf32, #tpu.memory_space<vmem>>, vector<8x32xf32>
    tpu.vector_store %arg14[%c0_13, %c0_14], %40 {strides = array<i32>} : memref<8x32xf32, #tpu.memory_space<vmem>>, vector<8x32xf32>,
    %c0_15 = arith.constant 0 : index
    %c0_16 = arith.constant 0 : index
    %42 = vector.load %arg15[%c0_15, %c0_16] : memref<8x32xf32, #tpu.memory_space<vmem>>, vector<8x32xf32>
    tpu.vector_store %arg15[%c0_15, %c0_16], %38 {strides = array<i32>} : memref<8x32xf32, #tpu.memory_space<vmem>>, vector<8x32xf32>,
    %c0_i32 = arith.constant 0 : i32
    %43 = arith.cmpi eq, %arg0, %c0_i32 : i32
    %44 = arith.extui %43 : i1 to i32
    %c0_i32_17 = arith.constant 0 : i32
    %45 = arith.cmpi ne, %44, %c0_i32_17 : i32
    scf.if %45 {
      %66 = vector.extract_strided_slice %40 {offsets = [0, 0], sizes = [1, 32], strides = [1, 1]} : vector<8x32xf32> to vector<1x32xf32>
      %c0_28 = arith.constant 0 : index
      %c0_29 = arith.constant 0 : index
      %67 = vector.load %arg18[%c0_28, %c0_29] : memref<1x32xf32, #tpu.memory_space<vmem>>, vector<1x32xf32>
      tpu.vector_store %arg18[%c0_28, %c0_29], %66 {strides = array<i32>} : memref<1x32xf32, #tpu.memory_space<vmem>>, vector<1x32xf32>,
      %c0_30 = arith.constant 0 : index
      %c0_31 = arith.constant 0 : index
      %68 = vector.load %arg6[%c0_30, %c0_31] : memref<32x32xf32, #tpu.memory_space<vmem>>, vector<32x32xf32>
      %cst_32 = arith.constant dense<0.000000e+00> : vector<1x32xf32>
      %69 = tpu.matmul %66, %68, %cst_32 {dimension_numbers = #tpu.dot_dimension_numbers<[1], [0], [0], [1], [0, 0, 1, 1], [], []>} : vector<1x32xf32>, vector<32x32xf32>, vector<1x32xf32> -> vector<1x32xf32>
      %c0_33 = arith.constant 0 : index
      %c0_34 = arith.constant 0 : index
      %70 = vector.load %arg7[%c0_33, %c0_34] : memref<1x32xf32, #tpu.memory_space<vmem>>, vector<1x32xf32>
      %71 = arith.addf %69, %70 : vector<1x32xf32>
      %c0_35 = arith.constant 0 : index
      %c0_36 = arith.constant 0 : index
      %72 = vector.load %arg19[%c0_35, %c0_36] : memref<1x32xf32, #tpu.memory_space<vmem>>, vector<1x32xf32>
      tpu.vector_store %arg19[%c0_35, %c0_36], %71 {strides = array<i32>} : memref<1x32xf32, #tpu.memory_space<vmem>>, vector<1x32xf32>,
      %cst_37 = arith.constant 0.000000e+00 : f32
      %73 = vector.broadcast %cst_37 : f32 to vector<1x32xf32>
      %c0_38 = arith.constant 0 : index
      %c0_39 = arith.constant 0 : index
      %74 = vector.load %arg20[%c0_38, %c0_39] : memref<1x32xf32, #tpu.memory_space<vmem>>, vector<1x32xf32>
      tpu.vector_store %arg20[%c0_38, %c0_39], %73 {strides = array<i32>} : memref<1x32xf32, #tpu.memory_space<vmem>>, vector<1x32xf32>,
    } else {
    }
    %46 = tpu.iota {dimensions = array<i32: 1>} : vector<1x8xi32>
    %c8_i32 = arith.constant 8 : i32
    %47 = arith.muli %arg0, %c8_i32 : i32
    %48 = vector.broadcast %47 : i32 to vector<1x8xi32>
    %49 = arith.addi %48, %46 : vector<1x8xi32>
    %c8_i32_18 = arith.constant 8 : i32
    %50 = vector.broadcast %c8_i32_18 : i32 to vector<1x8xi32>
    %51 = arith.cmpi slt, %49, %50 : vector<1x8xi32>
    %52 = arith.extui %51 : vector<1x8xi1> to vector<1x8xi32>
    %53 = arith.sitofp %52 : vector<1x8xi32> to vector<1x8xf32>
    %c0_19 = arith.constant 0 : index
    %c0_20 = arith.constant 0 : index
    %54 = vector.load %arg19[%c0_19, %c0_20] : memref<1x32xf32, #tpu.memory_space<vmem>>, vector<1x32xf32>
    %55 = vector.broadcast %54 : vector<1x32xf32> to vector<8x32xf32>
    %56 = arith.mulf %40, %55 : vector<8x32xf32>
    %57 = math.exp %56 : vector<8x32xf32>
    %58 = arith.mulf %40, %57 : vector<8x32xf32>
    %c0_21 = arith.constant 0 : index
    %c0_22 = arith.constant 0 : index
    %59 = vector.load %arg20[%c0_21, %c0_22] : memref<1x32xf32, #tpu.memory_space<vmem>>, vector<1x32xf32>
    %cst_23 = arith.constant dense<0.000000e+00> : vector<1x32xf32>
    %60 = tpu.matmul %53, %58, %cst_23 {dimension_numbers = #tpu.dot_dimension_numbers<[1], [0], [0], [1], [0, 0, 1, 1], [], []>} : vector<1x8xf32>, vector<8x32xf32>, vector<1x32xf32> -> vector<1x32xf32>
    %61 = arith.addf %59, %60 : vector<1x32xf32>
    %c0_24 = arith.constant 0 : index
    %c0_25 = arith.constant 0 : index
    %62 = vector.load %arg20[%c0_24, %c0_25] : memref<1x32xf32, #tpu.memory_space<vmem>>, vector<1x32xf32>
    tpu.vector_store %arg20[%c0_24, %c0_25], %61 {strides = array<i32>} : memref<1x32xf32, #tpu.memory_space<vmem>>, vector<1x32xf32>,
    %c0_i32_26 = arith.constant 0 : i32
    %63 = arith.cmpi eq, %arg0, %c0_i32_26 : i32
    %64 = arith.extui %63 : i1 to i32
    %c0_i32_27 = arith.constant 0 : i32
    %65 = arith.cmpi ne, %64, %c0_i32_27 : i32
    scf.if %65 {
      %c0_28 = arith.constant 0 : index
      %c0_29 = arith.constant 0 : index
      %66 = vector.load %arg18[%c0_28, %c0_29] : memref<1x32xf32, #tpu.memory_space<vmem>>, vector<1x32xf32>
      %c0_30 = arith.constant 0 : index
      %c0_31 = arith.constant 0 : index
      %67 = vector.load %arg20[%c0_30, %c0_31] : memref<1x32xf32, #tpu.memory_space<vmem>>, vector<1x32xf32>
      %c0_32 = arith.constant 0 : index
      %c0_33 = arith.constant 0 : index
      %68 = vector.load %arg8[%c0_32, %c0_33] : memref<32x32xf32, #tpu.memory_space<vmem>>, vector<32x32xf32>
      %cst_34 = arith.constant dense<0.000000e+00> : vector<1x32xf32>
      %69 = tpu.matmul %67, %68, %cst_34 {dimension_numbers = #tpu.dot_dimension_numbers<[1], [0], [0], [1], [0, 0, 1, 1], [], []>} : vector<1x32xf32>, vector<32x32xf32>, vector<1x32xf32> -> vector<1x32xf32>
      %c0_35 = arith.constant 0 : index
      %c0_36 = arith.constant 0 : index
      %70 = vector.load %arg9[%c0_35, %c0_36] : memref<1x32xf32, #tpu.memory_space<vmem>>, vector<1x32xf32>
      %71 = arith.addf %69, %70 : vector<1x32xf32>
      %c0_37 = arith.constant 0 : index
      %c0_38 = arith.constant 0 : index
      %72 = vector.load %arg10[%c0_37, %c0_38] : memref<32x32xf32, #tpu.memory_space<vmem>>, vector<32x32xf32>
      %cst_39 = arith.constant dense<0.000000e+00> : vector<1x32xf32>
      %73 = tpu.matmul %66, %72, %cst_39 {dimension_numbers = #tpu.dot_dimension_numbers<[1], [0], [0], [1], [0, 0, 1, 1], [], []>} : vector<1x32xf32>, vector<32x32xf32>, vector<1x32xf32> -> vector<1x32xf32>
      %74 = arith.addf %71, %73 : vector<1x32xf32>
      %c0_40 = arith.constant 0 : index
      %c0_41 = arith.constant 0 : index
      %75 = vector.load %arg11[%c0_40, %c0_41] : memref<1x32xf32, #tpu.memory_space<vmem>>, vector<1x32xf32>
      %76 = arith.addf %74, %75 : vector<1x32xf32>
      %77 = math.tanh %76 : vector<1x32xf32>
      %c0_42 = arith.constant 0 : index
      %c0_43 = arith.constant 0 : index
      %78 = vector.load %arg12[%c0_42, %c0_43] : memref<32x64xf32, #tpu.memory_space<vmem>>, vector<32x64xf32>
      %cst_44 = arith.constant dense<0.000000e+00> : vector<1x64xf32>
      %79 = tpu.matmul %77, %78, %cst_44 {dimension_numbers = #tpu.dot_dimension_numbers<[1], [0], [0], [1], [0, 0, 1, 1], [], []>} : vector<1x32xf32>, vector<32x64xf32>, vector<1x64xf32> -> vector<1x64xf32>
      %c0_45 = arith.constant 0 : index
      %c0_46 = arith.constant 0 : index
      %80 = vector.load %arg13[%c0_45, %c0_46] : memref<1x64xf32, #tpu.memory_space<vmem>>, vector<1x64xf32>
      %81 = arith.addf %79, %80 : vector<1x64xf32>
      %cst_47 = arith.constant dense<0xFF800000> : vector<1xf32>
      %82 = vector.multi_reduction <maximumf>, %81, %cst_47 [1] : vector<1x64xf32> to vector<1xf32>
      %83 = vector.shape_cast %82 : vector<1xf32> to vector<1x1xf32>
      %84 = vector.broadcast %83 : vector<1x1xf32> to vector<1x64xf32>
      %85 = arith.subf %81, %84 : vector<1x64xf32>
      %86 = math.exp %85 : vector<1x64xf32>
      %cst_48 = arith.constant dense<0.000000e+00> : vector<1xf32>
      %87 = vector.multi_reduction <add>, %86, %cst_48 [1] : vector<1x64xf32> to vector<1xf32>
      %88 = vector.shape_cast %87 : vector<1xf32> to vector<1x1xf32>
      %89 = tpu.reciprocal %88 {approx = true} : vector<1x1xf32> -> vector<1x1xf32>
      %c0_49 = arith.constant 0 : index
      %c0_50 = arith.constant 0 : index
      %90 = vector.load %arg16[%c0_49, %c0_50] : memref<1x32xf32, #tpu.memory_space<vmem>>, vector<1x32xf32>
      tpu.vector_store %arg16[%c0_49, %c0_50], %77 {strides = array<i32>} : memref<1x32xf32, #tpu.memory_space<vmem>>, vector<1x32xf32>,
      %c0_51 = arith.constant 0 : index
      %c0_52 = arith.constant 0 : index
      %91 = vector.load %arg17[%c0_51, %c0_52] : memref<1x1xf32, #tpu.memory_space<vmem>>, vector<1x1xf32>
      tpu.vector_store %arg17[%c0_51, %c0_52], %89 {strides = array<i32>} : memref<1x1xf32, #tpu.memory_space<vmem>>, vector<1x1xf32>,
    } else {
    }
    return
  }
  func.func @transform_0(%arg0: i32) -> (i32, i32) {
    %c0_i32 = arith.constant 0 : i32
    %c0_i32_0 = arith.constant 0 : i32
    return %arg0, %c0_i32 : i32, i32
  }
  func.func @transform_1(%arg0: i32) -> (i32, i32) {
    %c0_i32 = arith.constant 0 : i32
    %c0_i32_0 = arith.constant 0 : i32
    return %arg0, %c0_i32 : i32, i32
  }
  func.func @transform_2(%arg0: i32) -> (i32, i32) {
    %c0_i32 = arith.constant 0 : i32
    %c0_i32_0 = arith.constant 0 : i32
    return %arg0, %c0_i32 : i32, i32
  }
  func.func @transform_3(%arg0: i32) -> (i32, i32) {
    %c0_i32 = arith.constant 0 : i32
    %c0_i32_0 = arith.constant 0 : i32
    %c0_i32_1 = arith.constant 0 : i32
    return %c0_i32, %c0_i32_0 : i32, i32
  }
  func.func @transform_4(%arg0: i32) -> (i32, i32) {
    %c0_i32 = arith.constant 0 : i32
    %c0_i32_0 = arith.constant 0 : i32
    %c0_i32_1 = arith.constant 0 : i32
    return %c0_i32, %c0_i32_0 : i32, i32
  }
  func.func @transform_5(%arg0: i32) -> (i32, i32) {
    %c0_i32 = arith.constant 0 : i32
    %c0_i32_0 = arith.constant 0 : i32
    %c0_i32_1 = arith.constant 0 : i32
    return %c0_i32, %c0_i32_0 : i32, i32
  }
  func.func @transform_6(%arg0: i32) -> (i32, i32) {
    %c0_i32 = arith.constant 0 : i32
    %c0_i32_0 = arith.constant 0 : i32
    %c0_i32_1 = arith.constant 0 : i32
    return %c0_i32, %c0_i32_0 : i32, i32
  }
  func.func @transform_7(%arg0: i32) -> (i32, i32) {
    %c0_i32 = arith.constant 0 : i32
    %c0_i32_0 = arith.constant 0 : i32
    %c0_i32_1 = arith.constant 0 : i32
    return %c0_i32, %c0_i32_0 : i32, i32
  }
  func.func @transform_8(%arg0: i32) -> (i32, i32) {
    %c0_i32 = arith.constant 0 : i32
    %c0_i32_0 = arith.constant 0 : i32
    %c0_i32_1 = arith.constant 0 : i32
    return %c0_i32, %c0_i32_0 : i32, i32
  }
  func.func @transform_9(%arg0: i32) -> (i32, i32) {
    %c0_i32 = arith.constant 0 : i32
    %c0_i32_0 = arith.constant 0 : i32
    %c0_i32_1 = arith.constant 0 : i32
    return %c0_i32, %c0_i32_0 : i32, i32
  }
  func.func @transform_10(%arg0: i32) -> (i32, i32) {
    %c0_i32 = arith.constant 0 : i32
    %c0_i32_0 = arith.constant 0 : i32
    %c0_i32_1 = arith.constant 0 : i32
    return %c0_i32, %c0_i32_0 : i32, i32
  }
  func.func @transform_11(%arg0: i32) -> (i32, i32) {
    %c0_i32 = arith.constant 0 : i32
    %c0_i32_0 = arith.constant 0 : i32
    %c0_i32_1 = arith.constant 0 : i32
    return %c0_i32, %c0_i32_0 : i32, i32
  }
  func.func @transform_12(%arg0: i32) -> (i32, i32) {
    %c0_i32 = arith.constant 0 : i32
    %c0_i32_0 = arith.constant 0 : i32
    %c0_i32_1 = arith.constant 0 : i32
    return %c0_i32, %c0_i32_0 : i32, i32
  }
  func.func @transform_13(%arg0: i32) -> (i32, i32) {
    %c0_i32 = arith.constant 0 : i32
    %c0_i32_0 = arith.constant 0 : i32
    return %arg0, %c0_i32 : i32, i32
  }
  func.func @transform_14(%arg0: i32) -> (i32, i32) {
    %c0_i32 = arith.constant 0 : i32
    %c0_i32_0 = arith.constant 0 : i32
    return %arg0, %c0_i32 : i32, i32
  }
  func.func @transform_15(%arg0: i32) -> (i32, i32) {
    %c0_i32 = arith.constant 0 : i32
    %c0_i32_0 = arith.constant 0 : i32
    %c0_i32_1 = arith.constant 0 : i32
    return %c0_i32, %c0_i32_0 : i32, i32
  }
  func.func @transform_16(%arg0: i32) -> (i32, i32) {
    %c0_i32 = arith.constant 0 : i32
    %c0_i32_0 = arith.constant 0 : i32
    %c0_i32_1 = arith.constant 0 : i32
    return %c0_i32, %c0_i32_0 : i32, i32
  }
}

</mosaic_0001>

<llo_original>
// kernel: tpu_custom_call.1
$region0: #{tpu_custom_call.1}
  #allocation0 [shape = 'u32[]', space=smem, size = 0x4, offset = 0x4, fixed_abs, tag = 'smem constant byte address 0x4 - core index']
  #allocation1 [shape = 'u32[144,128]{1,0:T(1,128)}', space=vmem, size = 0x12000, scoped, tag = 'internal scratch']
  #allocation2 [shape = 'f32[1,32]{1,0:T(1,128)}', space=vmem, size = 0x200, scoped, tag = 'scratch operand']
  #allocation3 [shape = 'f32[1,32]{1,0:T(1,128)}', space=vmem, size = 0x200, scoped, tag = 'scratch operand']
  #allocation4 [shape = 'f32[1,32]{1,0:T(1,128)}', space=vmem, size = 0x200, scoped, tag = 'scratch operand']
  %s0 = inlined_call_operand.vmem [shape: f32[8,128], index: 0, kind: input, shape index: {}]
  %s1 = inlined_call_operand.vmem [shape: f32[8,32], index: 1, kind: input, shape index: {}]
  %s2 = inlined_call_operand.vmem [shape: f32[8,32], index: 2, kind: input, shape index: {}]
  %s3 = inlined_call_operand.vmem [shape: f32[128,160], index: 3, kind: input, shape index: {}]
  %s4 = inlined_call_operand.vmem [shape: f32[1,160], index: 4, kind: input, shape index: {}]
  %s5 = inlined_call_operand.vmem [shape: f32[32,32], index: 5, kind: input, shape index: {}]
  %s6 = inlined_call_operand.vmem [shape: f32[1,32], index: 6, kind: input, shape index: {}]
  %s7 = inlined_call_operand.vmem [shape: f32[32,32], index: 7, kind: input, shape index: {}]
  %s8 = inlined_call_operand.vmem [shape: f32[1,32], index: 8, kind: input, shape index: {}]
  %s9 = inlined_call_operand.vmem [shape: f32[32,32], index: 9, kind: input, shape index: {}]
  %s10 = inlined_call_operand.vmem [shape: f32[1,32], index: 10, kind: input, shape index: {}]
  %s11 = inlined_call_operand.vmem [shape: f32[32,64], index: 11, kind: input, shape index: {}]
  %s12 = inlined_call_operand.vmem [shape: f32[1,64], index: 12, kind: input, shape index: {}]
  %s13 = inlined_call_operand.hbm [shape: f32[8,32], index: 13, kind: output, shape index: {0}]
  %s14 = inlined_call_operand.hbm [shape: f32[8,32], index: 14, kind: output, shape index: {1}]
  %s15 = inlined_call_operand.hbm [shape: f32[1,32], index: 15, kind: output, shape index: {2}]
  %s16 = inlined_call_operand.hbm [shape: f32[1,1], index: 16, kind: output, shape index: {3}]
  %17 = xla_tuple %s13, %s14, %s15, %s16
  %s18 = sld [smem:[#allocation0]]
  $region94: #{tpu_custom_call.1} parent=0
    _
  %s20 = ssub.s32 1, %s18
  %s21 = scalar_select 0, %s20, %s18
  $region1: #{tpu_custom_call.1} parent=0
    #allocation5 [shape = 'u8[4096]{0}', space=vmem, size = 0x1000, scoped, tag = 'output window, operand 0, single buffered']
    #allocation6 [shape = 's32[1]{0}', space=sflag, size = 0x4, scoped, tag = 'scoped memory for tpu_custom_call.1']
    #allocation7 [shape = 'u8[4096]{0}', space=vmem, size = 0x1000, scoped, tag = 'output window, operand 1, single buffered']
    #allocation8 [shape = 's32[1]{0}', space=sflag, size = 0x4, scoped, tag = 'scoped memory for tpu_custom_call.1']
    #allocation9 [shape = 'u8[512]{0}', space=vmem, size = 0x400, scoped, tag = 'output window, operand 2, single buffered']
    #allocation10 [shape = 'u8[512]{0}', space=vmem, size = 0x400, scoped, tag = 'output window, operand 3, single buffered']
    #allocation11 [shape = 's32[1]{0}', space=sflag, size = 0x4, scoped, tag = 'scoped memory for tpu_custom_call.1']
    %22 = vsyncpa [#allocation6], 0
    %23 = vsyncpa [#allocation8], 0
    %24 = vsyncpa [#allocation11], 0
    // Predicated region
    $region2: #{tpu_custom_call.1} parent=1 // pred_check
      _
    $region3: #{tpu_custom_call.1} parent=1 // pred_check_branch
      %26 = sbr.rel (0) target = $region5
    $region4: #{tpu_custom_call.1} parent=1 // pred_region
      _
    $region5: #{tpu_custom_call.1} parent=1 // pred_fallthru
      _
    // Predicated region
    $region6: #{tpu_custom_call.1} parent=1 // pred_check
      _
    $region7: #{tpu_custom_call.1} parent=1 // pred_check_branch
      %28 = sbr.rel (0) target = $region9
    $region8: #{tpu_custom_call.1} parent=1 // pred_region
      _
    $region9: #{tpu_custom_call.1} parent=1 // pred_fallthru
      _
    // Predicated region
    $region10: #{tpu_custom_call.1} parent=1 // pred_check
      _
    $region11: #{tpu_custom_call.1} parent=1 // pred_check_branch
      %30 = sbr.rel (0) target = $region13
    $region12: #{tpu_custom_call.1} parent=1 // pred_region
      _
    $region13: #{tpu_custom_call.1} parent=1 // pred_fallthru
      _
    // Predicated region
    $region14: #{tpu_custom_call.1} parent=1 // pred_check
      _
    $region15: #{tpu_custom_call.1} parent=1 // pred_check_branch
      %32 = sbr.rel (0) target = $region17
    $region16: #{tpu_custom_call.1} parent=1 // pred_region
      _
    $region17: #{tpu_custom_call.1} parent=1 // pred_fallthru
      _
    // Predicated region
    $region18: #{tpu_custom_call.1} parent=1 // pred_check
      _
    $region19: #{tpu_custom_call.1} parent=1 // pred_check_branch
      %34 = sbr.rel (0) target = $region21
    $region20: #{tpu_custom_call.1} parent=1 // pred_region
      _
    $region21: #{tpu_custom_call.1} parent=1 // pred_fallthru
      _
    // Predicated region
    $region22: #{tpu_custom_call.1} parent=1 // pred_check
      _
    $region23: #{tpu_custom_call.1} parent=1 // pred_check_branch
      %36 = sbr.rel (0) target = $region25
    $region24: #{tpu_custom_call.1} parent=1 // pred_region
      _
    $region25: #{tpu_custom_call.1} parent=1 // pred_fallthru
      _
    // Predicated region
    $region26: #{tpu_custom_call.1} parent=1 // pred_check
      _
    $region27: #{tpu_custom_call.1} parent=1 // pred_check_branch
      %38 = sbr.rel (0) target = $region29
    $region28: #{tpu_custom_call.1} parent=1 // pred_region
      _
    $region29: #{tpu_custom_call.1} parent=1 // pred_fallthru
      _
    // Predicated region
    $region30: #{tpu_custom_call.1} parent=1 // pred_check
      _
    $region31: #{tpu_custom_call.1} parent=1 // pred_check_branch
      %40 = sbr.rel (0) target = $region33
    $region32: #{tpu_custom_call.1} parent=1 // pred_region
      _
    $region33: #{tpu_custom_call.1} parent=1 // pred_fallthru
      _
    // Predicated region
    $region34: #{tpu_custom_call.1} parent=1 // pred_check
      _
    $region35: #{tpu_custom_call.1} parent=1 // pred_check_branch
      %42 = sbr.rel (0) target = $region37
    $region36: #{tpu_custom_call.1} parent=1 // pred_region
      _
    $region37: #{tpu_custom_call.1} parent=1 // pred_fallthru
      _
    // Predicated region
    $region38: #{tpu_custom_call.1} parent=1 // pred_check
      _
    $region39: #{tpu_custom_call.1} parent=1 // pred_check_branch
      %44 = sbr.rel (0) target = $region41
    $region40: #{tpu_custom_call.1} parent=1 // pred_region
      _
    $region41: #{tpu_custom_call.1} parent=1 // pred_fallthru
      _
    // Predicated region
    $region42: #{tpu_custom_call.1} parent=1 // pred_check
      _
    $region43: #{tpu_custom_call.1} parent=1 // pred_check_branch
      %46 = sbr.rel (0) target = $region45
    $region44: #{tpu_custom_call.1} parent=1 // pred_region
      _
    $region45: #{tpu_custom_call.1} parent=1 // pred_fallthru
      _
    // Predicated region
    $region46: #{tpu_custom_call.1} parent=1 // pred_check
      _
    $region47: #{tpu_custom_call.1} parent=1 // pred_check_branch
      %48 = sbr.rel (0) target = $region49
    $region48: #{tpu_custom_call.1} parent=1 // pred_region
      _
    $region49: #{tpu_custom_call.1} parent=1 // pred_fallthru
      _
    // Predicated region
    $region50: #{tpu_custom_call.1} parent=1 // pred_check
      _
    $region51: #{tpu_custom_call.1} parent=1 // pred_check_branch
      %50 = sbr.rel (0) target = $region53
    $region52: #{tpu_custom_call.1} parent=1 // pred_region
      _
    $region53: #{tpu_custom_call.1} parent=1 // pred_fallthru
      _
    %v51 = vld [vmem:[%s0] sm:$0xff]
    %v52 = vld [vmem:[%s3] sm:$0xff]
    %v53 = vld [vmem:[%s3 + $0x8] sm:$0xff]
    %v54 = vld [vmem:[%s3 + $0x10] sm:$0xff]
    %v55 = vld [vmem:[%s3 + $0x18] sm:$0xff]
    %v56 = vld [vmem:[%s3 + $0x20] sm:$0xff]
    %v57 = vld [vmem:[%s3 + $0x28] sm:$0xff]
    %v58 = vld [vmem:[%s3 + $0x30] sm:$0xff]
    %v59 = vld [vmem:[%s3 + $0x38] sm:$0xff]
    %v60 = vld [vmem:[%s3 + $0x40] sm:$0xff]
    %v61 = vld [vmem:[%s3 + $0x48] sm:$0xff]
    %v62 = vld [vmem:[%s3 + $0x50] sm:$0xff]
    %v63 = vld [vmem:[%s3 + $0x58] sm:$0xff]
    %v64 = vld [vmem:[%s3 + $0x60] sm:$0xff]
    %v65 = vld [vmem:[%s3 + $0x68] sm:$0xff]
    %v66 = vld [vmem:[%s3 + $0x70] sm:$0xff]
    %v67 = vld [vmem:[%s3 + $0x78] sm:$0xff]
    %v68 = vld [vmem:[%s3 + $0x80] sm:$0xff]
    %v69 = vld [vmem:[%s3 + $0x88] sm:$0xff]
    %v70 = vld [vmem:[%s3 + $0x90] sm:$0xff]
    %v71 = vld [vmem:[%s3 + $0x98] sm:$0xff]
    %v72 = vld [vmem:[%s3 + $0xa0] sm:$0xff]
    %v73 = vld [vmem:[%s3 + $0xa8] sm:$0xff]
    %v74 = vld [vmem:[%s3 + $0xb0] sm:$0xff]
    %v75 = vld [vmem:[%s3 + $0xb8] sm:$0xff]
    %v76 = vld [vmem:[%s3 + $0xc0] sm:$0xff]
    %v77 = vld [vmem:[%s3 + $0xc8] sm:$0xff]
    %v78 = vld [vmem:[%s3 + $0xd0] sm:$0xff]
    %v79 = vld [vmem:[%s3 + $0xd8] sm:$0xff]
    %v80 = vld [vmem:[%s3 + $0xe0] sm:$0xff]
    %v81 = vld [vmem:[%s3 + $0xe8] sm:$0xff]
    %v82 = vld [vmem:[%s3 + $0xf0] sm:$0xff]
    %v83 = vld [vmem:[%s3 + $0xf8] sm:$0xff]
    %v84 = vld [vmem:[%s4] sm:$0x3]
    %v86 = vlaneseq
    %v87 = vshrl.u32 %v86, 7
    %v88 = vsub.s32 0, %v87
    %v89 = vrot.slane %v84, %v88
    %v90 = vlaneseq
    %v91 = vshrl.u32 %v90, 7
    %v92 = vsub.s32 1, %v91
    %v93 = vrot.slane %v84, %v92
    %96 = vmatprep.subr.mxu0 %v53
    %97 = vmatpush1.msra.mxu0 %v52
    %98 = vmatprep.subr.mxu0 %v55
    %99 = vmatpush1.msra.mxu0 %v54
    %100 = vmatprep.subr.mxu0 %v57
    %101 = vmatpush1.msra.mxu0 %v56
    %102 = vmatprep.subr.mxu0 %v59
    %103 = vmatpush1.msra.mxu0 %v58
    %104 = vmatprep.subr.mxu0 %v61
    %105 = vmatpush1.msra.mxu0 %v60
    %106 = vmatprep.subr.mxu0 %v63
    %107 = vmatpush1.msra.mxu0 %v62
    %108 = vmatprep.subr.mxu0 %v65
    %109 = vmatpush1.msra.mxu0 %v64
    %110 = vmatprep.subr.mxu0 %v67
    %111 = vmatpush1.msra.mxu0 %v66
    %112 = vmatprep.subr.mxu0 %v69
    %113 = vmatpush1.msra.mxu0 %v68
    %114 = vmatprep.subr.mxu0 %v71
    %115 = vmatpush1.msra.mxu0 %v70
    %116 = vmatprep.subr.mxu0 %v73
    %117 = vmatpush1.msra.mxu0 %v72
    %118 = vmatprep.subr.mxu0 %v75
    %119 = vmatpush1.msra.mxu0 %v74
    %120 = vmatprep.subr.mxu0 %v77
    %121 = vmatpush1.msra.mxu0 %v76
    %122 = vmatprep.subr.mxu0 %v79
    %123 = vmatpush1.msra.mxu0 %v78
    %124 = vmatprep.subr.mxu0 %v81
    %125 = vmatpush1.msra.mxu0 %v80
    %126 = vmatprep.subr.mxu0 %v83
    %127 = vmatpush1.msra.mxu0 %v82
    %128 = vmatprep.subr.mxu0 0.0
    %129 = vmatpush1.msra.mxu0 0.0
    %130 = vmatprep.subr.mxu0 0.0
    %131 = vmatpush1.msra.mxu0 0.0
    %132 = vmatprep.subr.mxu0 0.0
    %133 = vmatpush1.msra.mxu0 0.0
    %134 = vmatprep.subr.mxu0 0.0
    %135 = vmatpush1.msra.mxu0 0.0
    %136 = vmatprep.subr.mxu0 0.0
    %137 = vmatpush1.msra.mxu0 0.0
    %138 = vmatprep.subr.mxu0 0.0
    %139 = vmatpush1.msra.mxu0 0.0
    %140 = vmatprep.subr.mxu0 0.0
    %141 = vmatpush1.msra.mxu0 0.0
    %142 = vmatprep.subr.mxu0 0.0
    %143 = vmatpush1.msra.mxu0 0.0
    %144 = vmatprep.subr.mxu0 0.0
    %145 = vmatpush1.msra.mxu0 0.0
    %146 = vmatprep.subr.mxu0 0.0
    %147 = vmatpush1.msra.mxu0 0.0
    %148 = vmatprep.subr.mxu0 0.0
    %149 = vmatpush1.msra.mxu0 0.0
    %150 = vmatprep.subr.mxu0 0.0
    %151 = vmatpush1.msra.mxu0 0.0
    %152 = vmatprep.subr.mxu0 0.0
    %153 = vmatpush1.msra.mxu0 0.0
    %154 = vmatprep.subr.mxu0 0.0
    %155 = vmatpush1.msra.mxu0 0.0
    %156 = vmatprep.subr.mxu0 0.0
    %157 = vmatpush1.msra.mxu0 0.0
    %158 = vmatprep.subr.mxu0 0.0
    %159 = vmatpush1.msra.mxu0 0.0
    %160 = vmatprep.mubr.f32.mxu0 0.0
    %161 = vmatmul.mubr.f32.gmra.mrb[0].mxu0 %v51
    %v162 = vpop.f32.mrb[0].mxu0
    %v163 = vadd.f32 %v89, %v162
    %v164 = vpop.f32.mrb[0].mxu0
    %v165 = vadd.f32 %v93, %v164
    %166 = vdwg.mxu0
    %v167 = vxor.u32 %v163, 2147483648
    %v168 = vmul.f32 %v167, 1.442695
    %v169 = vpow.pop %v168
    %v170 = vadd.f32 %v169, 1.0
    %v171 = vrcp.pop %v170
    %v172 = vmul.f32 1.0, %v171
    %v173 = vtanh.pop %v163
    %v174 = vxor.u32 %v165, 2147483648
    %v175 = vmul.f32 %v174, 1.442695
    %v176 = vpow.pop %v175
    %v177 = vadd.f32 %v176, 1.0
    %v178 = vrcp.pop %v177
    %v179 = vmul.f32 1.0, %v178
    %181 = vrot.lane.b32.xlu0 %v173, 64
    %v182 = vpop.permute.xlu0 %181
    %v184 = vmul.f32 %v172, %v182
    %v185 = vld [vmem:[%s1] sm:$0xff]
    %187 = vrot.lane.b32.xlu0 %v185, 96
    %v188 = vpop.permute.xlu0 %187
    %v190 = vmul.f32 %v172, %v188
    %192 = vrot.lane.b32.xlu0 %v190, 32
    %v193 = vpop.permute.xlu0 %192
    %v195 = vadd.f32 %v184, %v193
    %v196 = vld [vmem:[%s2] sm:$0xff]
    %v197 = vmul.f32 %v179, %v196
    %v198 = vadd.f32 %v195, %v197
    %v199 = vtanh.pop %v198
    %201 = vrot.lane.b32.xlu0 %v199, 32
    %v202 = vpop.permute.xlu0 %201
    %v204 = vmul.f32 %v172, %v202
    %206 = vrot.lane.b32.xlu0 %v204, 96
    %v207 = vpop.permute.xlu0 %206
    %vm209 = vcmask 261120
    %210 = vst.msk [vmem:[#allocation5] sm:$0xff] %vm209, %v207
    %211 = vst.msk [vmem:[#allocation7] sm:$0xff] %vm209, %v198
    %p212 = scmp.eq.s32.totalorder 0, 0
    // Predicated region
    $region54: #{tpu_custom_call.1} parent=1 // pred_check
      %p213 = pneg %p212
    $region55: #{tpu_custom_call.1} parent=1 // pred_check_branch
      %215 = sbr.rel (%p213) target = $region57
    $region56: #{tpu_custom_call.1} parent=1 // pred_region
      %vm216 = vcmask 253952
      %217 = vst.msk [vmem:[#allocation2] sm:$0x1] %vm216, %v207
      %v218 = vld [vmem:[%s5] sm:$0xff]
      %v219 = vld [vmem:[%s5 + $0x8] sm:$0xff]
      %v220 = vld [vmem:[%s5 + $0x10] sm:$0xff]
      %v221 = vld [vmem:[%s5 + $0x18] sm:$0xff]
      %v222 = vld [vmem:[%s6] sm:$0x1]
      %v223 = vsel %vm209, %v207, 0
      %225 = vmatprep.subr.mxu0 0.0
      %226 = vmatpush1.msra.mxu0 %v218
      %227 = vmatprep.subr.mxu0 0.0
      %228 = vmatpush1.msra.mxu0 %v219
      %229 = vmatprep.subr.mxu0 0.0
      %230 = vmatpush1.msra.mxu0 %v220
      %231 = vmatprep.subr.mxu0 0.0
      %232 = vmatpush1.msra.mxu0 %v221
      %233 = vmatprep.subr.mxu0 0.0
      %234 = vmatpush1.msra.mxu0 0.0
      %235 = vmatprep.subr.mxu0 0.0
      %236 = vmatpush1.msra.mxu0 0.0
      %237 = vmatprep.subr.mxu0 0.0
      %238 = vmatpush1.msra.mxu0 0.0
      %239 = vmatprep.subr.mxu0 0.0
      %240 = vmatpush1.msra.mxu0 0.0
      %241 = vmatprep.subr.mxu0 0.0
      %242 = vmatpush1.msra.mxu0 0.0
      %243 = vmatprep.subr.mxu0 0.0
      %244 = vmatpush1.msra.mxu0 0.0
      %245 = vmatprep.subr.mxu0 0.0
      %246 = vmatpush1.msra.mxu0 0.0
      %247 = vmatprep.subr.mxu0 0.0
      %248 = vmatpush1.msra.mxu0 0.0
      %249 = vmatprep.subr.mxu0 0.0
      %250 = vmatpush1.msra.mxu0 0.0
      %251 = vmatprep.subr.mxu0 0.0
      %252 = vmatpush1.msra.mxu0 0.0
      %253 = vmatprep.subr.mxu0 0.0
      %254 = vmatpush1.msra.mxu0 0.0
      %255 = vmatprep.subr.mxu0 0.0
      %256 = vmatpush1.msra.mxu0 0.0
      %257 = vmatprep.subr.mxu0 0.0
      %258 = vmatpush1.msra.mxu0 0.0
      %259 = vmatprep.subr.mxu0 0.0
      %260 = vmatpush1.msra.mxu0 0.0
      %261 = vmatprep.subr.mxu0 0.0
      %262 = vmatpush1.msra.mxu0 0.0
      %263 = vmatprep.subr.mxu0 0.0
      %264 = vmatpush1.msra.mxu0 0.0
      %265 = vmatprep.subr.mxu0 0.0
      %266 = vmatpush1.msra.mxu0 0.0
      %267 = vmatprep.subr.mxu0 0.0
      %268 = vmatpush1.msra.mxu0 0.0
      %269 = vmatprep.subr.mxu0 0.0
      %270 = vmatpush1.msra.mxu0 0.0
      %271 = vmatprep.subr.mxu0 0.0
      %272 = vmatpush1.msra.mxu0 0.0
      %273 = vmatprep.subr.mxu0 0.0
      %274 = vmatpush1.msra.mxu0 0.0
      %275 = vmatprep.subr.mxu0 0.0
      %276 = vmatpush1.msra.mxu0 0.0
      %277 = vmatprep.subr.mxu0 0.0
      %278 = vmatpush1.msra.mxu0 0.0
      %279 = vmatprep.subr.mxu0 0.0
      %280 = vmatpush1.msra.mxu0 0.0
      %281 = vmatprep.subr.mxu0 0.0
      %282 = vmatpush1.msra.mxu0 0.0
      %283 = vmatprep.subr.mxu0 0.0
      %284 = vmatpush1.msra.mxu0 0.0
      %285 = vmatprep.subr.mxu0 0.0
      %286 = vmatpush1.msra.mxu0 0.0
      %287 = vmatprep.subr.mxu0 0.0
      %288 = vmatpush1.msra.mxu0 0.0
      %289 = vmatprep.mubr.f32.mxu0 0.0
      %290 = vmatmul.mubr.f32.gmra.mrb[0].mxu0 %v223
      %v291 = vpop.f32.mrb[0].mxu0
      %v292 = vadd.f32 %v222, %v291
      %v293 = vpop.f32.mrb[0].mxu0
      %294 = vdwg.mxu0
      %295 = vst.msk [vmem:[#allocation3] sm:$0x1] %vm216, %v292
      %296 = vst.msk [vmem:[#allocation4] sm:$0x1] %vm216, 0.0
    $region57: #{tpu_custom_call.1} parent=1 // pred_fallthru
      _
    %v297 = vlaneseq
    %v298 = vand.u32 %v297, 127
    %s299 = smul.u32 0, 8
    %v300 = vstv %s299
    %v301 = vadd.s32 %v300, %v298
    %vm302 = vcmp.lt.s32.totalorder %v301, 8
    %v303 = vsel %vm302, 1, 0
    %v304 = vcvt.s32.f32 %v303
    %v305 = vld [vmem:[#allocation3] sm:$0x1]
    %v307 = vlaneseq
    %v308 = vshrl.u32 %v307, 7
    %v309 = vsub.s32 0, %v308
    %v310 = vrot.slane %v305, %v309
    %311 = vrot.lane.b32.xlu0 %v310, 32
    %v312 = vpop.permute.xlu0 %311
    %v314 = vmul.f32 %v204, %v312
    %v315 = vmul.f32 %v314, 1.442695
    %v316 = vpow.pop %v315
    %v317 = vmul.f32 %v204, %v316
    %v318 = vld [vmem:[#allocation4] sm:$0x1]
    %320 = vrot.lane.b32.xlu0 %v317, 96
    %v321 = vpop.permute.xlu0 %320
    %vm323 = vcmask 64512
    %v325 = vsel %vm323, %v304, 0
    %327 = vmatprep.subr.mxu0 0.0
    %328 = vmatpush1.msra.mxu0 %v321
    %329 = vmatprep.subr.mxu0 0.0
    %330 = vmatpush1.msra.mxu0 0.0
    %331 = vmatprep.subr.mxu0 0.0
    %332 = vmatpush1.msra.mxu0 0.0
    %333 = vmatprep.subr.mxu0 0.0
    %334 = vmatpush1.msra.mxu0 0.0
    %335 = vmatprep.subr.mxu0 0.0
    %336 = vmatpush1.msra.mxu0 0.0
    %337 = vmatprep.subr.mxu0 0.0
    %338 = vmatpush1.msra.mxu0 0.0
    %339 = vmatprep.subr.mxu0 0.0
    %340 = vmatpush1.msra.mxu0 0.0
    %341 = vmatprep.subr.mxu0 0.0
    %342 = vmatpush1.msra.mxu0 0.0
    %343 = vmatprep.subr.mxu0 0.0
    %344 = vmatpush1.msra.mxu0 0.0
    %345 = vmatprep.subr.mxu0 0.0
    %346 = vmatpush1.msra.mxu0 0.0
    %347 = vmatprep.subr.mxu0 0.0
    %348 = vmatpush1.msra.mxu0 0.0
    %349 = vmatprep.subr.mxu0 0.0
    %350 = vmatpush1.msra.mxu0 0.0
    %351 = vmatprep.subr.mxu0 0.0
    %352 = vmatpush1.msra.mxu0 0.0
    %353 = vmatprep.subr.mxu0 0.0
    %354 = vmatpush1.msra.mxu0 0.0
    %355 = vmatprep.subr.mxu0 0.0
    %356 = vmatpush1.msra.mxu0 0.0
    %357 = vmatprep.subr.mxu0 0.0
    %358 = vmatpush1.msra.mxu0 0.0
    %359 = vmatprep.subr.mxu0 0.0
    %360 = vmatpush1.msra.mxu0 0.0
    %361 = vmatprep.subr.mxu0 0.0
    %362 = vmatpush1.msra.mxu0 0.0
    %363 = vmatprep.subr.mxu0 0.0
    %364 = vmatpush1.msra.mxu0 0.0
    %365 = vmatprep.subr.mxu0 0.0
    %366 = vmatpush1.msra.mxu0 0.0
    %367 = vmatprep.subr.mxu0 0.0
    %368 = vmatpush1.msra.mxu0 0.0
    %369 = vmatprep.subr.mxu0 0.0
    %370 = vmatpush1.msra.mxu0 0.0
    %371 = vmatprep.subr.mxu0 0.0
    %372 = vmatpush1.msra.mxu0 0.0
    %373 = vmatprep.subr.mxu0 0.0
    %374 = vmatpush1.msra.mxu0 0.0
    %375 = vmatprep.subr.mxu0 0.0
    %376 = vmatpush1.msra.mxu0 0.0
    %377 = vmatprep.subr.mxu0 0.0
    %378 = vmatpush1.msra.mxu0 0.0
    %379 = vmatprep.subr.mxu0 0.0
    %380 = vmatpush1.msra.mxu0 0.0
    %381 = vmatprep.subr.mxu0 0.0
    %382 = vmatpush1.msra.mxu0 0.0
    %383 = vmatprep.subr.mxu0 0.0
    %384 = vmatpush1.msra.mxu0 0.0
    %385 = vmatprep.subr.mxu0 0.0
    %386 = vmatpush1.msra.mxu0 0.0
    %387 = vmatprep.subr.mxu0 0.0
    %388 = vmatpush1.msra.mxu0 0.0
    %389 = vmatprep.subr.mxu0 0.0
    %390 = vmatpush1.msra.mxu0 0.0
    %391 = vmatprep.mubr.f32.mxu0 0.0
    %392 = vmatmul.mubr.f32.gmra.mrb[0].mxu0 %v325
    %v393 = vpop.f32.mrb[0].mxu0
    %v394 = vadd.f32 0.0, %v393
    %v395 = vpop.f32.mrb[0].mxu0
    %396 = vdwg.mxu0
    %v397 = vadd.f32 %v318, %v394
    %vm398 = vcmask 253952
    %399 = vst.msk [vmem:[#allocation4] sm:$0x1] %vm398, %v397
    // Predicated region
    $region58: #{tpu_custom_call.1} parent=1 // pred_check
      %p400 = pneg %p212
    $region59: #{tpu_custom_call.1} parent=1 // pred_check_branch
      %402 = sbr.rel (%p400) target = $region61
    $region60: #{tpu_custom_call.1} parent=1 // pred_region
      %v403 = vld [vmem:[#allocation2] sm:$0x1]
      %v404 = vld [vmem:[#allocation4] sm:$0x1]
      %v405 = vld [vmem:[%s7] sm:$0xff]
      %v406 = vld [vmem:[%s7 + $0x8] sm:$0xff]
      %v407 = vld [vmem:[%s7 + $0x10] sm:$0xff]
      %v408 = vld [vmem:[%s7 + $0x18] sm:$0xff]
      %v409 = vld [vmem:[%s8] sm:$0x1]
      %v411 = vsel %vm209, %v404, 0
      %413 = vmatprep.subr.mxu0 0.0
      %414 = vmatpush1.msra.mxu0 %v405
      %415 = vmatprep.subr.mxu0 0.0
      %416 = vmatpush1.msra.mxu0 %v406
      %417 = vmatprep.subr.mxu0 0.0
      %418 = vmatpush1.msra.mxu0 %v407
      %419 = vmatprep.subr.mxu0 0.0
      %420 = vmatpush1.msra.mxu0 %v408
      %421 = vmatprep.subr.mxu0 0.0
      %422 = vmatpush1.msra.mxu0 0.0
      %423 = vmatprep.subr.mxu0 0.0
      %424 = vmatpush1.msra.mxu0 0.0
      %425 = vmatprep.subr.mxu0 0.0
      %426 = vmatpush1.msra.mxu0 0.0
      %427 = vmatprep.subr.mxu0 0.0
      %428 = vmatpush1.msra.mxu0 0.0
      %429 = vmatprep.subr.mxu0 0.0
      %430 = vmatpush1.msra.mxu0 0.0
      %431 = vmatprep.subr.mxu0 0.0
      %432 = vmatpush1.msra.mxu0 0.0
      %433 = vmatprep.subr.mxu0 0.0
      %434 = vmatpush1.msra.mxu0 0.0
      %435 = vmatprep.subr.mxu0 0.0
      %436 = vmatpush1.msra.mxu0 0.0
      %437 = vmatprep.subr.mxu0 0.0
      %438 = vmatpush1.msra.mxu0 0.0
      %439 = vmatprep.subr.mxu0 0.0
      %440 = vmatpush1.msra.mxu0 0.0
      %441 = vmatprep.subr.mxu0 0.0
      %442 = vmatpush1.msra.mxu0 0.0
      %443 = vmatprep.subr.mxu0 0.0
      %444 = vmatpush1.msra.mxu0 0.0
      %445 = vmatprep.subr.mxu0 0.0
      %446 = vmatpush1.msra.mxu0 0.0
      %447 = vmatprep.subr.mxu0 0.0
      %448 = vmatpush1.msra.mxu0 0.0
      %449 = vmatprep.subr.mxu0 0.0
      %450 = vmatpush1.msra.mxu0 0.0
      %451 = vmatprep.subr.mxu0 0.0
      %452 = vmatpush1.msra.mxu0 0.0
      %453 = vmatprep.subr.mxu0 0.0
      %454 = vmatpush1.msra.mxu0 0.0
      %455 = vmatprep.subr.mxu0 0.0
      %456 = vmatpush1.msra.mxu0 0.0
      %457 = vmatprep.subr.mxu0 0.0
      %458 = vmatpush1.msra.mxu0 0.0
      %459 = vmatprep.subr.mxu0 0.0
      %460 = vmatpush1.msra.mxu0 0.0
      %461 = vmatprep.subr.mxu0 0.0
      %462 = vmatpush1.msra.mxu0 0.0
      %463 = vmatprep.subr.mxu0 0.0
      %464 = vmatpush1.msra.mxu0 0.0
      %465 = vmatprep.subr.mxu0 0.0
      %466 = vmatpush1.msra.mxu0 0.0
      %467 = vmatprep.subr.mxu0 0.0
      %468 = vmatpush1.msra.mxu0 0.0
      %469 = vmatprep.subr.mxu0 0.0
      %470 = vmatpush1.msra.mxu0 0.0
      %471 = vmatprep.subr.mxu0 0.0
      %472 = vmatpush1.msra.mxu0 0.0
      %473 = vmatprep.subr.mxu0 0.0
      %474 = vmatpush1.msra.mxu0 0.0
      %475 = vmatprep.subr.mxu0 0.0
      %476 = vmatpush1.msra.mxu0 0.0
      %477 = vmatprep.mubr.f32.mxu0 0.0
      %478 = vmatmul.mubr.f32.gmra.mrb[0].mxu0 %v411
      %v479 = vpop.f32.mrb[0].mxu0
      %v480 = vadd.f32 %v409, %v479
      %v481 = vpop.f32.mrb[0].mxu0
      %482 = vdwg.mxu0
      %v483 = vld [vmem:[%s9] sm:$0xff]
      %v484 = vld [vmem:[%s9 + $0x8] sm:$0xff]
      %v485 = vld [vmem:[%s9 + $0x10] sm:$0xff]
      %v486 = vld [vmem:[%s9 + $0x18] sm:$0xff]
      %v488 = vsel %vm209, %v403, 0
      %490 = vmatprep.subr.mxu0 0.0
      %491 = vmatpush1.msra.mxu0 %v483
      %492 = vmatprep.subr.mxu0 0.0
      %493 = vmatpush1.msra.mxu0 %v484
      %494 = vmatprep.subr.mxu0 0.0
      %495 = vmatpush1.msra.mxu0 %v485
      %496 = vmatprep.subr.mxu0 0.0
      %497 = vmatpush1.msra.mxu0 %v486
      %498 = vmatprep.subr.mxu0 0.0
      %499 = vmatpush1.msra.mxu0 0.0
      %500 = vmatprep.subr.mxu0 0.0
      %501 = vmatpush1.msra.mxu0 0.0
      %502 = vmatprep.subr.mxu0 0.0
      %503 = vmatpush1.msra.mxu0 0.0
      %504 = vmatprep.subr.mxu0 0.0
      %505 = vmatpush1.msra.mxu0 0.0
      %506 = vmatprep.subr.mxu0 0.0
      %507 = vmatpush1.msra.mxu0 0.0
      %508 = vmatprep.subr.mxu0 0.0
      %509 = vmatpush1.msra.mxu0 0.0
      %510 = vmatprep.subr.mxu0 0.0
      %511 = vmatpush1.msra.mxu0 0.0
      %512 = vmatprep.subr.mxu0 0.0
      %513 = vmatpush1.msra.mxu0 0.0
      %514 = vmatprep.subr.mxu0 0.0
      %515 = vmatpush1.msra.mxu0 0.0
      %516 = vmatprep.subr.mxu0 0.0
      %517 = vmatpush1.msra.mxu0 0.0
      %518 = vmatprep.subr.mxu0 0.0
      %519 = vmatpush1.msra.mxu0 0.0
      %520 = vmatprep.subr.mxu0 0.0
      %521 = vmatpush1.msra.mxu0 0.0
      %522 = vmatprep.subr.mxu0 0.0
      %523 = vmatpush1.msra.mxu0 0.0
      %524 = vmatprep.subr.mxu0 0.0
      %525 = vmatpush1.msra.mxu0 0.0
      %526 = vmatprep.subr.mxu0 0.0
      %527 = vmatpush1.msra.mxu0 0.0
      %528 = vmatprep.subr.mxu0 0.0
      %529 = vmatpush1.msra.mxu0 0.0
      %530 = vmatprep.subr.mxu0 0.0
      %531 = vmatpush1.msra.mxu0 0.0
      %532 = vmatprep.subr.mxu0 0.0
      %533 = vmatpush1.msra.mxu0 0.0
      %534 = vmatprep.subr.mxu0 0.0
      %535 = vmatpush1.msra.mxu0 0.0
      %536 = vmatprep.subr.mxu0 0.0
      %537 = vmatpush1.msra.mxu0 0.0
      %538 = vmatprep.subr.mxu0 0.0
      %539 = vmatpush1.msra.mxu0 0.0
      %540 = vmatprep.subr.mxu0 0.0
      %541 = vmatpush1.msra.mxu0 0.0
      %542 = vmatprep.subr.mxu0 0.0
      %543 = vmatpush1.msra.mxu0 0.0
      %544 = vmatprep.subr.mxu0 0.0
      %545 = vmatpush1.msra.mxu0 0.0
      %546 = vmatprep.subr.mxu0 0.0
      %547 = vmatpush1.msra.mxu0 0.0
      %548 = vmatprep.subr.mxu0 0.0
      %549 = vmatpush1.msra.mxu0 0.0
      %550 = vmatprep.subr.mxu0 0.0
      %551 = vmatpush1.msra.mxu0 0.0
      %552 = vmatprep.subr.mxu0 0.0
      %553 = vmatpush1.msra.mxu0 0.0
      %554 = vmatprep.mubr.f32.mxu0 0.0
      %555 = vmatmul.mubr.f32.gmra.mrb[0].mxu0 %v488
      %v556 = vpop.f32.mrb[0].mxu0
      %v557 = vadd.f32 0.0, %v556
      %v558 = vpop.f32.mrb[0].mxu0
      %559 = vdwg.mxu0
      %v560 = vadd.f32 %v480, %v557
      %v561 = vld [vmem:[%s10] sm:$0x1]
      %v562 = vadd.f32 %v560, %v561
      %v563 = vtanh.pop %v562
      %v564 = vld [vmem:[%s11] sm:$0xff]
      %v565 = vld [vmem:[%s11 + $0x8] sm:$0xff]
      %v566 = vld [vmem:[%s11 + $0x10] sm:$0xff]
      %v567 = vld [vmem:[%s11 + $0x18] sm:$0xff]
      %v568 = vld [vmem:[%s12] sm:$0x1]
      %v570 = vsel %vm209, %v563, 0
      %572 = vmatprep.subr.mxu0 0.0
      %573 = vmatpush1.msra.mxu0 %v564
      %574 = vmatprep.subr.mxu0 0.0
      %575 = vmatpush1.msra.mxu0 %v565
      %576 = vmatprep.subr.mxu0 0.0
      %577 = vmatpush1.msra.mxu0 %v566
      %578 = vmatprep.subr.mxu0 0.0
      %579 = vmatpush1.msra.mxu0 %v567
      %580 = vmatprep.subr.mxu0 0.0
      %581 = vmatpush1.msra.mxu0 0.0
      %582 = vmatprep.subr.mxu0 0.0
      %583 = vmatpush1.msra.mxu0 0.0
      %584 = vmatprep.subr.mxu0 0.0
      %585 = vmatpush1.msra.mxu0 0.0
      %586 = vmatprep.subr.mxu0 0.0
      %587 = vmatpush1.msra.mxu0 0.0
      %588 = vmatprep.subr.mxu0 0.0
      %589 = vmatpush1.msra.mxu0 0.0
      %590 = vmatprep.subr.mxu0 0.0
      %591 = vmatpush1.msra.mxu0 0.0
      %592 = vmatprep.subr.mxu0 0.0
      %593 = vmatpush1.msra.mxu0 0.0
      %594 = vmatprep.subr.mxu0 0.0
      %595 = vmatpush1.msra.mxu0 0.0
      %596 = vmatprep.subr.mxu0 0.0
      %597 = vmatpush1.msra.mxu0 0.0
      %598 = vmatprep.subr.mxu0 0.0
      %599 = vmatpush1.msra.mxu0 0.0
      %600 = vmatprep.subr.mxu0 0.0
      %601 = vmatpush1.msra.mxu0 0.0
      %602 = vmatprep.subr.mxu0 0.0
      %603 = vmatpush1.msra.mxu0 0.0
      %604 = vmatprep.subr.mxu0 0.0
      %605 = vmatpush1.msra.mxu0 0.0
      %606 = vmatprep.subr.mxu0 0.0
      %607 = vmatpush1.msra.mxu0 0.0
      %608 = vmatprep.subr.mxu0 0.0
      %609 = vmatpush1.msra.mxu0 0.0
      %610 = vmatprep.subr.mxu0 0.0
      %611 = vmatpush1.msra.mxu0 0.0
      %612 = vmatprep.subr.mxu0 0.0
      %613 = vmatpush1.msra.mxu0 0.0
      %614 = vmatprep.subr.mxu0 0.0
      %615 = vmatpush1.msra.mxu0 0.0
      %616 = vmatprep.subr.mxu0 0.0
      %617 = vmatpush1.msra.mxu0 0.0
      %618 = vmatprep.subr.mxu0 0.0
      %619 = vmatpush1.msra.mxu0 0.0
      %620 = vmatprep.subr.mxu0 0.0
      %621 = vmatpush1.msra.mxu0 0.0
      %622 = vmatprep.subr.mxu0 0.0
      %623 = vmatpush1.msra.mxu0 0.0
      %624 = vmatprep.subr.mxu0 0.0
      %625 = vmatpush1.msra.mxu0 0.0
      %626 = vmatprep.subr.mxu0 0.0
      %627 = vmatpush1.msra.mxu0 0.0
      %628 = vmatprep.subr.mxu0 0.0
      %629 = vmatpush1.msra.mxu0 0.0
      %630 = vmatprep.subr.mxu0 0.0
      %631 = vmatpush1.msra.mxu0 0.0
      %632 = vmatprep.subr.mxu0 0.0
      %633 = vmatpush1.msra.mxu0 0.0
      %634 = vmatprep.subr.mxu0 0.0
      %635 = vmatpush1.msra.mxu0 0.0
      %636 = vmatprep.mubr.f32.mxu0 0.0
      %637 = vmatmul.mubr.f32.gmra.mrb[0].mxu0 %v570
      %v638 = vpop.f32.mrb[0].mxu0
      %v639 = vadd.f32 %v568, %v638
      %v640 = vpop.f32.mrb[0].mxu0
      %641 = vdwg.mxu0
      %vm642 = vcmask 516096
      %v643 = vsel %vm642, %v639, -inf
      %644 = vmax.xlane.f32.xlu0 %v643
      %v645 = vpop.xlane.xlu0 %644
      %v646 = vsub.f32 %v639, %v645
      %v647 = vmul.f32 %v646, 1.442695
      %v648 = vpow.pop %v647
      %v649 = vsel %vm642, %v648, 0.0
      %650 = vadd.xlane.f32.xlu0 %v649
      %v651 = vpop.xlane.xlu0 %650
      %v652 = vrcp.pop %v651
      %653 = vst.msk [vmem:[#allocation9] sm:$0x1] %vm398, %v563
      %vm654 = vcmask 0
      %655 = vst.msk [vmem:[#allocation10] sm:$0x1] %vm654, %v652
    $region61: #{tpu_custom_call.1} parent=1 // pred_fallthru
      _
    // Predicated region
    $region62: #{tpu_custom_call.1} parent=1 // pred_check
      _
    $region63: #{tpu_custom_call.1} parent=1 // pred_check_branch
      %657 = sbr.rel (0) target = $region65
    $region64: #{tpu_custom_call.1} parent=1 // pred_region
      %s659 = ssub.s32 128, 128
      %660 = vsyncadd [#allocation6], %s659
      %s662 = sshll.u32 [#allocation5], 4
      %s663 = int_to_ptr.vmem [resolvable:$true] %s662
      %665 = dma.vmem_to_hbm [thread:$0]  %s663, 128, %s13, [#allocation6]
    $region65: #{tpu_custom_call.1} parent=1 // pred_fallthru
      _
    // Predicated region
    $region66: #{tpu_custom_call.1} parent=1 // pred_check
      _
    $region67: #{tpu_custom_call.1} parent=1 // pred_check_branch
      %667 = sbr.rel (0) target = $region69
    $region68: #{tpu_custom_call.1} parent=1 // pred_region
      %s669 = ssub.s32 128, 128
      %670 = vsyncadd [#allocation8], %s669
      %s672 = sshll.u32 [#allocation7], 4
      %s673 = int_to_ptr.vmem [resolvable:$true] %s672
      %675 = dma.vmem_to_hbm [thread:$0]  %s673, 128, %s14, [#allocation8]
    $region69: #{tpu_custom_call.1} parent=1 // pred_fallthru
      _
    // Predicated region
    $region70: #{tpu_custom_call.1} parent=1 // pred_check
      _
    $region71: #{tpu_custom_call.1} parent=1 // pred_check_branch
      %677 = sbr.rel (0) target = $region73
    $region72: #{tpu_custom_call.1} parent=1 // pred_region
      %s679 = ssub.s32 16, 16
      %680 = vsyncadd [#allocation8], %s679
      %s682 = sshll.u32 [#allocation9], 4
      %s683 = int_to_ptr.vmem [resolvable:$true] %s682
      %685 = dma.vmem_to_hbm [thread:$0]  %s683, 16, %s15, [#allocation8]
    $region73: #{tpu_custom_call.1} parent=1 // pred_fallthru
      _
    // Predicated region
    $region74: #{tpu_custom_call.1} parent=1 // pred_check
      _
    $region75: #{tpu_custom_call.1} parent=1 // pred_check_branch
      %687 = sbr.rel (0) target = $region77
    $region76: #{tpu_custom_call.1} parent=1 // pred_region
      %s689 = ssub.s32 16, 16
      %690 = vsyncadd [#allocation11], %s689
      %s692 = sshll.u32 [#allocation10], 4
      %s693 = int_to_ptr.vmem [resolvable:$true] %s692
      %695 = dma.vmem_to_hbm [thread:$0]  %s693, 16, %s16, [#allocation11]
    $region77: #{tpu_custom_call.1} parent=1 // pred_fallthru
      _
    // Predicated region
    $region78: #{tpu_custom_call.1} parent=1 // pred_check
      _
    $region79: #{tpu_custom_call.1} parent=1 // pred_check_branch
      %697 = sbr.rel (0) target = $region81
    $region80: #{tpu_custom_call.1} parent=1 // pred_region
      %698 = dma.done [#allocation6], 128
    $region81: #{tpu_custom_call.1} parent=1 // pred_fallthru
      _
    // Predicated region
    $region82: #{tpu_custom_call.1} parent=1 // pred_check
      _
    $region83: #{tpu_custom_call.1} parent=1 // pred_check_branch
      %700 = sbr.rel (0) target = $region85
    $region84: #{tpu_custom_call.1} parent=1 // pred_region
      %701 = dma.done [#allocation8], 128
    $region85: #{tpu_custom_call.1} parent=1 // pred_fallthru
      _
    // Predicated region
    $region86: #{tpu_custom_call.1} parent=1 // pred_check
      _
    $region87: #{tpu_custom_call.1} parent=1 // pred_check_branch
      %703 = sbr.rel (0) target = $region89
    $region88: #{tpu_custom_call.1} parent=1 // pred_region
      %704 = dma.done [#allocation8], 16
    $region89: #{tpu_custom_call.1} parent=1 // pred_fallthru
      _
    // Predicated region
    $region90: #{tpu_custom_call.1} parent=1 // pred_check
      _
    $region91: #{tpu_custom_call.1} parent=1 // pred_check_branch
      %706 = sbr.rel (0) target = $region93
    $region92: #{tpu_custom_call.1} parent=1 // pred_region
      %707 = dma.done [#allocation11], 16
    $region93: #{tpu_custom_call.1} parent=1 // pred_fallthru
      _
    %708 = vsyncpa [#allocation6], 1
    %709 = vsyncpa [#allocation8], 1
    %710 = vsyncpa [#allocation11], 1

</llo_original>
